<compile_context>
chip_gen: v5e
topology: v5e:2x2
jax: 0.10.0
libtpu: 0.0.40
codegen_flags: <defaults>
</compile_context>

<pallas_src>
import jax
import jax.numpy as jnp
from jax.experimental import pallas as pl
from jax.experimental.pallas import tpu as pltpu

# ---------------- small stand-in sizes ----------------
B = 2                 # batch
B_PAD = 8             # batch padded to one sublane group for MXU M dim
SEQ = 8               # text sequence length
VOCAB = 50            # toy vocab
TEXT_HID = 32         # stand-in for BERT hidden_size (=768)
IMG_C_IN = 3          # RGB
IMG_HW = 16           # image spatial size
CONV_K = 3
CONV_STRIDE = 2
IMG_HID = 64          # stand-in for ResNet18 feature dim (=512)
FUSION = TEXT_HID + IMG_HID               # 96
FUSION_PAD = 128                          # fused activation padded to one full lane tile
CLS_HID = 256
NUM_CLASSES = 3
OUT_PAD = 128                             # lane-dense output width
OUT_HW = IMG_HW // CONV_STRIDE            # 8
NPATCH = OUT_HW * OUT_HW                  # 64
PATCH_K = CONV_K * CONV_K * IMG_C_IN      # 27
PATCH_K_PAD = 32                          # aligned im2col contraction dim


# ---------------- the fused kernel ----------------
def mm_kernel(emb_ref, tpool_ref, patches_ref, ipool_ref,
              pool_w_ref, pool_b_ref,
              conv_w_ref, conv_b_ref,
              fc1_w_ref, fc1_b_ref,
              fc2_w_ref, fc2_b_ref,
              out_ref):
    # ---- text branch: masked mean pool (as one matmul) + pooler dense + tanh ----
    # tpool rows already contain mask/count (and zero rows for batch padding).
    pooled = jnp.dot(tpool_ref[...], emb_ref[...],
                     preferred_element_type=jnp.float32)            # [8, 32]
    text_feat = jnp.tanh(
        jnp.dot(pooled, pool_w_ref[...], preferred_element_type=jnp.float32)
        + pool_b_ref[...])                                           # [8, 32]

    # ---- image branch: im2col conv as ONE [128,32]x[32,64] matmul + ReLU ----
    conv = jnp.dot(patches_ref[...], conv_w_ref[...],
                   preferred_element_type=jnp.float32) + conv_b_ref[...]   # [128, 64]
    conv = jnp.maximum(conv, 0.0)
    # global average pool + batch padding folded into the [8, 128] pooling matrix (1/P entries).
    img_feat = jnp.dot(ipool_ref[...], conv,
                       preferred_element_type=jnp.float32)           # [8, 64]

    # ---- classifier head ----
    # cat([text, img]) padded to one full 128-lane vreg -> single K=128 MXU matmul.
    pad = jnp.zeros((B_PAD, FUSION_PAD - FUSION), jnp.float32)
    fused = jnp.concatenate([text_feat, img_feat, pad], axis=-1)      # [8, 128]
    h = jnp.maximum(
        jnp.dot(fused, fc1_w_ref[...], preferred_element_type=jnp.float32)
        + fc1_b_ref[...], 0.0)                                        # [8, 256]
    # Dropout(0.1) is identity in eval mode.
    # Lane-dense output (128 cols, cols >= NUM_CLASSES are zero weights) -> unmasked stores.
    out_ref[...] = (jnp.dot(h, fc2_w_ref[...], preferred_element_type=jnp.float32)
                    + fc2_b_ref[...])                                 # [8, 128]


# ---------------- shared glue: im2col patch extraction ----------------
def _im2col(images):
    """images [B, C, H, W] -> patches [B, NPATCH, PATCH_K] (3x3, stride 2, pad 1)."""
    patches = jax.lax.conv_general_dilated_patches(
        images,
        filter_shape=(CONV_K, CONV_K),
        window_strides=(CONV_STRIDE, CONV_STRIDE),
        padding=((1, 1), (1, 1)),
        dimension_numbers=("NCHW", "OIHW", "NCHW"))                  # [B, C*K*K, OH, OW]
    patches = jnp.transpose(patches, (0, 2, 3, 1))                   # [B, OH, OW, C*K*K]
    return patches.reshape(B, NPATCH, PATCH_K)


# ---------------- wrapper (glue: gather, im2col, padding, pallas_call) ----------------
@jax.jit
def multimodal_forward(input_ids, attention_mask, images, params):
    # text glue: embedding lookup, flattened for a single 2D matmul inside the kernel
    emb_flat = params["emb_table"][input_ids].reshape(B * SEQ, TEXT_HID)     # [16, 32]
    mask = attention_mask.astype(jnp.float32)                               # [B, S]
    cnt = jnp.maximum(jnp.sum(mask, axis=1, keepdims=True), 1.0)            # guard all-pad rows
    w = mask / cnt                                                          # [B, S]

    # block-diagonal pooling matrices (also implement batch padding B -> B_PAD)
    eye = jnp.eye(B_PAD, B, dtype=jnp.float32)                              # [8, B]
    text_pool = (eye[:, :, None] * w[None]).reshape(B_PAD, B * SEQ)         # [8, 16]
    img_pool = (eye[:, :, None]
                * jnp.full((1, B, NPATCH), 1.0 / NPATCH, jnp.float32)
                ).reshape(B_PAD, B * NPATCH)                                # [8, 128]

    # image glue: single fused im2col op, flatten batch, zero-pad K 27 -> 32
    patches = _im2col(images).reshape(B * NPATCH, PATCH_K)                  # [128, 27]
    patches = jnp.pad(patches, ((0, 0), (0, PATCH_K_PAD - PATCH_K)))        # [128, 32]

    # weight padding (zeros contribute nothing -> bit-identical math)
    conv_w = jnp.pad(params["conv_w"], ((0, PATCH_K_PAD - PATCH_K), (0, 0)))   # [32, 64]
    fc1_w = jnp.pad(params["fc1_w"], ((0, FUSION_PAD - FUSION), (0, 0)))       # [128, 256]
    fc2_w = jnp.pad(params["fc2_w"], ((0, 0), (0, OUT_PAD - NUM_CLASSES)))     # [256, 128]
    fc2_b = jnp.pad(params["fc2_b"], ((0, 0), (0, OUT_PAD - NUM_CLASSES)))     # [1, 128]

    vmem = pl.BlockSpec(memory_space=pltpu.MemorySpace.VMEM)
    kernel_inputs = (emb_flat, text_pool, patches, img_pool,
                     params["pool_w"], params["pool_b"],
                     conv_w, params["conv_b"],
                     fc1_w, params["fc1_b"],
                     fc2_w, fc2_b)
    out = pl.pallas_call(
        mm_kernel,
        out_shape=jax.ShapeDtypeStruct((B_PAD, OUT_PAD), jnp.float32),
        in_specs=[vmem] * len(kernel_inputs),
        out_specs=vmem,
    )(*kernel_inputs)
    return out[:B, :NUM_CLASSES]


# ---------------- pure-JAX reference for a correctness check ----------------
def reference_forward(input_ids, attention_mask, images, params):
    emb = params["emb_table"][input_ids]
    mask = attention_mask.astype(jnp.float32)
    cnt = jnp.maximum(mask.sum(1, keepdims=True), 1.0)
    pooled = (emb * mask[:, :, None]).sum(1) / cnt
    text_feat = jnp.tanh(pooled @ params["pool_w"] + params["pool_b"])

    patches = _im2col(images)                                               # [B, P, 27]
    conv = jnp.maximum(jnp.einsum('bpk,kc->bpc', patches, params["conv_w"])
                       + params["conv_b"], 0.0)
    img_feat = conv.mean(1)

    fused = jnp.concatenate([text_feat, img_feat], axis=1)
    h = jnp.maximum(fused @ params["fc1_w"] + params["fc1_b"], 0.0)
    return h @ params["fc2_w"] + params["fc2_b"]


# ---------------- deterministic parameter init ----------------
def init_params(key):
    ks = jax.random.split(key, 5)

    def rnd(k, shape, scale):
        return jax.random.normal(k, shape, jnp.float32) * scale

    return dict(
        emb_table=rnd(ks[0], (VOCAB, TEXT_HID), 0.02),
        pool_w=rnd(ks[1], (TEXT_HID, TEXT_HID), 1.0 / jnp.sqrt(TEXT_HID)),
        pool_b=jnp.zeros((1, TEXT_HID), jnp.float32),
        conv_w=rnd(ks[2], (PATCH_K, IMG_HID), 1.0 / jnp.sqrt(PATCH_K)),
        conv_b=jnp.zeros((1, IMG_HID), jnp.float32),
        fc1_w=rnd(ks[3], (FUSION, CLS_HID), 1.0 / jnp.sqrt(FUSION)),
        fc1_b=jnp.zeros((1, CLS_HID), jnp.float32),
        fc2_w=rnd(ks[4], (CLS_HID, NUM_CLASSES), 1.0 / jnp.sqrt(CLS_HID)),
        fc2_b=jnp.zeros((1, NUM_CLASSES), jnp.float32),
    )


if __name__ == "__main__":
    key = jax.random.PRNGKey(0)
    k_ids, k_img, k_par = jax.random.split(key, 3)

    input_ids = jax.random.randint(k_ids, (B, SEQ), 0, VOCAB, dtype=jnp.int32)
    # first 6 tokens valid, last 2 padded
    attention_mask = jnp.concatenate(
        [jnp.ones((B, 6), jnp.int32), jnp.zeros((B, SEQ - 6), jnp.int32)], axis=1)
    images = jax.random.normal(k_img, (B, IMG_C_IN, IMG_HW, IMG_HW), jnp.float32)

    params = init_params(k_par)

    logits = multimodal_forward(input_ids, attention_mask, images, params)
    logits = jax.block_until_ready(logits)
    assert logits.shape == (B, NUM_CLASSES)

    ref = reference_forward(input_ids, attention_mask, images, params)
    assert jnp.allclose(logits, ref, rtol=1e-3, atol=1e-3), (logits, ref)

    print("KERNEL_OK")
</pallas_src>

<mosaic_0001>
module attributes {stable_mosaic.version = 11 : i64} {
  func.func @mm_kernel(%arg0: memref<16x32xf32, #tpu.memory_space<vmem>>, %arg1: memref<8x16xf32, #tpu.memory_space<vmem>>, %arg2: memref<128x32xf32, #tpu.memory_space<vmem>>, %arg3: memref<8x128xf32, #tpu.memory_space<vmem>>, %arg4: memref<32x32xf32, #tpu.memory_space<vmem>>, %arg5: memref<1x32xf32, #tpu.memory_space<vmem>>, %arg6: memref<32x64xf32, #tpu.memory_space<vmem>>, %arg7: memref<1x64xf32, #tpu.memory_space<vmem>>, %arg8: memref<128x256xf32, #tpu.memory_space<vmem>>, %arg9: memref<1x256xf32, #tpu.memory_space<vmem>>, %arg10: memref<256x128xf32, #tpu.memory_space<vmem>>, %arg11: memref<1x128xf32, #tpu.memory_space<vmem>>, %arg12: memref<8x128xf32, #tpu.memory_space<vmem>>) attributes {dimension_semantics = [], scalar_prefetch = 0 : i64, scratch_operands = 0 : i64, tpu.core_type = #tpu.core_type<tc>} {
    %c0 = arith.constant 0 : index
    %c0_0 = arith.constant 0 : index
    %0 = vector.load %arg1[%c0, %c0_0] : memref<8x16xf32, #tpu.memory_space<vmem>>, vector<8x16xf32>
    %c0_1 = arith.constant 0 : index
    %c0_2 = arith.constant 0 : index
    %1 = vector.load %arg0[%c0_1, %c0_2] : memref<16x32xf32, #tpu.memory_space<vmem>>, vector<16x32xf32>
    %cst = arith.constant dense<0.000000e+00> : vector<8x32xf32>
    %2 = tpu.matmul %0, %1, %cst {dimension_numbers = #tpu.dot_dimension_numbers<[1], [0], [0], [1], [0, 0, 1, 1], [], []>} : vector<8x16xf32>, vector<16x32xf32>, vector<8x32xf32> -> vector<8x32xf32>
    %c0_3 = arith.constant 0 : index
    %c0_4 = arith.constant 0 : index
    %3 = vector.load %arg4[%c0_3, %c0_4] : memref<32x32xf32, #tpu.memory_space<vmem>>, vector<32x32xf32>
    %cst_5 = arith.constant dense<0.000000e+00> : vector<8x32xf32>
    %4 = tpu.matmul %2, %3, %cst_5 {dimension_numbers = #tpu.dot_dimension_numbers<[1], [0], [0], [1], [0, 0, 1, 1], [], []>} : vector<8x32xf32>, vector<32x32xf32>, vector<8x32xf32> -> vector<8x32xf32>
    %c0_6 = arith.constant 0 : index
    %c0_7 = arith.constant 0 : index
    %5 = vector.load %arg5[%c0_6, %c0_7] : memref<1x32xf32, #tpu.memory_space<vmem>>, vector<1x32xf32>
    %6 = vector.broadcast %5 : vector<1x32xf32> to vector<8x32xf32>
    %7 = arith.addf %4, %6 : vector<8x32xf32>
    %8 = math.tanh %7 : vector<8x32xf32>
    %c0_8 = arith.constant 0 : index
    %c0_9 = arith.constant 0 : index
    %9 = vector.load %arg2[%c0_8, %c0_9] : memref<128x32xf32, #tpu.memory_space<vmem>>, vector<128x32xf32>
    %c0_10 = arith.constant 0 : index
    %c0_11 = arith.constant 0 : index
    %10 = vector.load %arg6[%c0_10, %c0_11] : memref<32x64xf32, #tpu.memory_space<vmem>>, vector<32x64xf32>
    %cst_12 = arith.constant dense<0.000000e+00> : vector<128x64xf32>
    %11 = tpu.matmul %9, %10, %cst_12 {dimension_numbers = #tpu.dot_dimension_numbers<[1], [0], [0], [1], [0, 0, 1, 1], [], []>} : vector<128x32xf32>, vector<32x64xf32>, vector<128x64xf32> -> vector<128x64xf32>
    %c0_13 = arith.constant 0 : index
    %c0_14 = arith.constant 0 : index
    %12 = vector.load %arg7[%c0_13, %c0_14] : memref<1x64xf32, #tpu.memory_space<vmem>>, vector<1x64xf32>
    %13 = vector.broadcast %12 : vector<1x64xf32> to vector<128x64xf32>
    %14 = arith.addf %11, %13 : vector<128x64xf32>
    %cst_15 = arith.constant 0.000000e+00 : f32
    %15 = vector.broadcast %cst_15 : f32 to vector<128x64xf32>
    %16 = arith.maximumf %14, %15 : vector<128x64xf32>
    %c0_16 = arith.constant 0 : index
    %c0_17 = arith.constant 0 : index
    %17 = vector.load %arg3[%c0_16, %c0_17] : memref<8x128xf32, #tpu.memory_space<vmem>>, vector<8x128xf32>
    %cst_18 = arith.constant dense<0.000000e+00> : vector<8x64xf32>
    %18 = tpu.matmul %17, %16, %cst_18 {dimension_numbers = #tpu.dot_dimension_numbers<[1], [0], [0], [1], [0, 0, 1, 1], [], []>} : vector<8x128xf32>, vector<128x64xf32>, vector<8x64xf32> -> vector<8x64xf32>
    %cst_19 = arith.constant 0.000000e+00 : f32
    %19 = vector.broadcast %cst_19 : f32 to vector<8x32xf32>
    %20 = tpu.concatenate %8, %18, %19 in 1 : vector<8x32xf32>, vector<8x64xf32>, vector<8x32xf32> -> vector<8x128xf32>
    %c0_20 = arith.constant 0 : index
    %c0_21 = arith.constant 0 : index
    %21 = vector.load %arg8[%c0_20, %c0_21] : memref<128x256xf32, #tpu.memory_space<vmem>>, vector<128x256xf32>
    %cst_22 = arith.constant dense<0.000000e+00> : vector<8x256xf32>
    %22 = tpu.matmul %20, %21, %cst_22 {dimension_numbers = #tpu.dot_dimension_numbers<[1], [0], [0], [1], [0, 0, 1, 1], [], []>} : vector<8x128xf32>, vector<128x256xf32>, vector<8x256xf32> -> vector<8x256xf32>
    %c0_23 = arith.constant 0 : index
    %c0_24 = arith.constant 0 : index
    %23 = vector.load %arg9[%c0_23, %c0_24] : memref<1x256xf32, #tpu.memory_space<vmem>>, vector<1x256xf32>
    %24 = vector.broadcast %23 : vector<1x256xf32> to vector<8x256xf32>
    %25 = arith.addf %22, %24 : vector<8x256xf32>
    %cst_25 = arith.constant 0.000000e+00 : f32
    %26 = vector.broadcast %cst_25 : f32 to vector<8x256xf32>
    %27 = arith.maximumf %25, %26 : vector<8x256xf32>
    %c0_26 = arith.constant 0 : index
    %c0_27 = arith.constant 0 : index
    %28 = vector.load %arg10[%c0_26, %c0_27] : memref<256x128xf32, #tpu.memory_space<vmem>>, vector<256x128xf32>
    %cst_28 = arith.constant dense<0.000000e+00> : vector<8x128xf32>
    %29 = tpu.matmul %27, %28, %cst_28 {dimension_numbers = #tpu.dot_dimension_numbers<[1], [0], [0], [1], [0, 0, 1, 1], [], []>} : vector<8x256xf32>, vector<256x128xf32>, vector<8x128xf32> -> vector<8x128xf32>
    %c0_29 = arith.constant 0 : index
    %c0_30 = arith.constant 0 : index
    %30 = vector.load %arg11[%c0_29, %c0_30] : memref<1x128xf32, #tpu.memory_space<vmem>>, vector<1x128xf32>
    %31 = vector.broadcast %30 : vector<1x128xf32> to vector<8x128xf32>
    %32 = arith.addf %29, %31 : vector<8x128xf32>
    %c0_31 = arith.constant 0 : index
    %c0_32 = arith.constant 0 : index
    %33 = vector.load %arg12[%c0_31, %c0_32] : memref<8x128xf32, #tpu.memory_space<vmem>>, vector<8x128xf32>
    tpu.vector_store %arg12[%c0_31, %c0_32], %32 {strides = array<i32>} : memref<8x128xf32, #tpu.memory_space<vmem>>, vector<8x128xf32>,
    return
  }
}

</mosaic_0001>

<llo_original>
// kernel: multimodal_forward.1
$region0: #{multimodal_forward.1}
  #allocation0 [shape = 'u32[]', space=smem, size = 0x4, offset = 0x4, fixed_abs, tag = 'smem constant byte address 0x4 - core index']
  #allocation1 [shape = 'u32[72,128]{1,0:T(1,128)}', space=vmem, size = 0x9000, scoped, tag = 'internal scratch']
  %s0 = inlined_call_operand.vmem [shape: f32[16,32], index: 0, kind: input, shape index: {}]
  %s1 = inlined_call_operand.vmem [shape: f32[8,16], index: 1, kind: input, shape index: {}]
  %s2 = inlined_call_operand.vmem [shape: f32[128,32], index: 2, kind: input, shape index: {}]
  %s3 = inlined_call_operand.vmem [shape: f32[8,128], index: 3, kind: input, shape index: {}]
  %s4 = inlined_call_operand.vmem [shape: f32[32,32], index: 4, kind: input, shape index: {}]
  %s5 = inlined_call_operand.vmem [shape: f32[1,32], index: 5, kind: input, shape index: {}]
  %s6 = inlined_call_operand.vmem [shape: f32[32,64], index: 6, kind: input, shape index: {}]
  %s7 = inlined_call_operand.vmem [shape: f32[1,64], index: 7, kind: input, shape index: {}]
  %s8 = inlined_call_operand.vmem [shape: f32[128,256], index: 8, kind: input, shape index: {}]
  %s9 = inlined_call_operand.vmem [shape: f32[1,256], index: 9, kind: input, shape index: {}]
  %s10 = inlined_call_operand.vmem [shape: f32[256,128], index: 10, kind: input, shape index: {}]
  %s11 = inlined_call_operand.vmem [shape: f32[1,128], index: 11, kind: input, shape index: {}]
  %s12 = inlined_call_operand.vmem [shape: f32[8,128], index: 12, kind: output, shape index: {}]
  %s13 = sld [smem:[#allocation0]]
  $region58: #{multimodal_forward.1} parent=0
    _
  %s15 = ssub.s32 1, %s13
  %s16 = scalar_select 0, %s15, %s13
  // Predicated region
  $region2: #{multimodal_forward.1} parent=0 // pred_check
    _
  $region3: #{multimodal_forward.1} parent=0 // pred_check_branch
    %18 = sbr.rel (0) target = $region5
  $region4: #{multimodal_forward.1} parent=0 // pred_region
    _
  $region5: #{multimodal_forward.1} parent=0 // pred_fallthru
    _
  // Predicated region
  $region6: #{multimodal_forward.1} parent=0 // pred_check
    _
  $region7: #{multimodal_forward.1} parent=0 // pred_check_branch
    %20 = sbr.rel (0) target = $region9
  $region8: #{multimodal_forward.1} parent=0 // pred_region
    _
  $region9: #{multimodal_forward.1} parent=0 // pred_fallthru
    _
  // Predicated region
  $region10: #{multimodal_forward.1} parent=0 // pred_check
    _
  $region11: #{multimodal_forward.1} parent=0 // pred_check_branch
    %22 = sbr.rel (0) target = $region13
  $region12: #{multimodal_forward.1} parent=0 // pred_region
    _
  $region13: #{multimodal_forward.1} parent=0 // pred_fallthru
    _
  // Predicated region
  $region14: #{multimodal_forward.1} parent=0 // pred_check
    _
  $region15: #{multimodal_forward.1} parent=0 // pred_check_branch
    %24 = sbr.rel (0) target = $region17
  $region16: #{multimodal_forward.1} parent=0 // pred_region
    _
  $region17: #{multimodal_forward.1} parent=0 // pred_fallthru
    _
  // Predicated region
  $region18: #{multimodal_forward.1} parent=0 // pred_check
    _
  $region19: #{multimodal_forward.1} parent=0 // pred_check_branch
    %26 = sbr.rel (0) target = $region21
  $region20: #{multimodal_forward.1} parent=0 // pred_region
    _
  $region21: #{multimodal_forward.1} parent=0 // pred_fallthru
    _
  // Predicated region
  $region22: #{multimodal_forward.1} parent=0 // pred_check
    _
  $region23: #{multimodal_forward.1} parent=0 // pred_check_branch
    %28 = sbr.rel (0) target = $region25
  $region24: #{multimodal_forward.1} parent=0 // pred_region
    _
  $region25: #{multimodal_forward.1} parent=0 // pred_fallthru
    _
  // Predicated region
  $region26: #{multimodal_forward.1} parent=0 // pred_check
    _
  $region27: #{multimodal_forward.1} parent=0 // pred_check_branch
    %30 = sbr.rel (0) target = $region29
  $region28: #{multimodal_forward.1} parent=0 // pred_region
    _
  $region29: #{multimodal_forward.1} parent=0 // pred_fallthru
    _
  // Predicated region
  $region30: #{multimodal_forward.1} parent=0 // pred_check
    _
  $region31: #{multimodal_forward.1} parent=0 // pred_check_branch
    %32 = sbr.rel (0) target = $region33
  $region32: #{multimodal_forward.1} parent=0 // pred_region
    _
  $region33: #{multimodal_forward.1} parent=0 // pred_fallthru
    _
  // Predicated region
  $region34: #{multimodal_forward.1} parent=0 // pred_check
    _
  $region35: #{multimodal_forward.1} parent=0 // pred_check_branch
    %34 = sbr.rel (0) target = $region37
  $region36: #{multimodal_forward.1} parent=0 // pred_region
    _
  $region37: #{multimodal_forward.1} parent=0 // pred_fallthru
    _
  // Predicated region
  $region38: #{multimodal_forward.1} parent=0 // pred_check
    _
  $region39: #{multimodal_forward.1} parent=0 // pred_check_branch
    %36 = sbr.rel (0) target = $region41
  $region40: #{multimodal_forward.1} parent=0 // pred_region
    _
  $region41: #{multimodal_forward.1} parent=0 // pred_fallthru
    _
  // Predicated region
  $region42: #{multimodal_forward.1} parent=0 // pred_check
    _
  $region43: #{multimodal_forward.1} parent=0 // pred_check_branch
    %38 = sbr.rel (0) target = $region45
  $region44: #{multimodal_forward.1} parent=0 // pred_region
    _
  $region45: #{multimodal_forward.1} parent=0 // pred_fallthru
    _
  // Predicated region
  $region46: #{multimodal_forward.1} parent=0 // pred_check
    _
  $region47: #{multimodal_forward.1} parent=0 // pred_check_branch
    %40 = sbr.rel (0) target = $region49
  $region48: #{multimodal_forward.1} parent=0 // pred_region
    _
  $region49: #{multimodal_forward.1} parent=0 // pred_fallthru
    _
  %v41 = vld [vmem:[%s1] sm:$0xff]
  %v42 = vld [vmem:[%s0] sm:$0xff]
  %v43 = vld [vmem:[%s0 + $0x8] sm:$0xff]
  %vm44 = vcmask 130048
  %v46 = vsel %vm44, %v41, 0
  %48 = vmatpush.msra.mxu0 0.0
  %49 = vmatpush.msra.mxu0 0.0
  %50 = vmatpush.msra.mxu0 0.0
  %51 = vmatpush.msra.mxu0 0.0
  %52 = vmatpush.msra.mxu0 0.0
  %53 = vmatpush.msra.mxu0 0.0
  %54 = vmatpush.msra.mxu0 0.0
  %55 = vmatpush.msra.mxu0 0.0
  %56 = vmatpush.msra.mxu0 0.0
  %57 = vmatpush.msra.mxu0 0.0
  %58 = vmatpush.msra.mxu0 0.0
  %59 = vmatpush.msra.mxu0 0.0
  %60 = vmatpush.msra.mxu0 0.0
  %61 = vmatpush.msra.mxu0 0.0
  %62 = vmatpush.msra.mxu0 %v43
  %63 = vmatpush.msra.mxu0 %v42
  %64 = vmatmul.f32.gmra.mxu0 %v46
  %v65 = vpop.f32.mrf.mxu0
  %v66 = vadd.f32 0.0, %v65
  %67 = vdwg.mxu0
  %v68 = vld [vmem:[%s4] sm:$0xff]
  %v69 = vld [vmem:[%s4 + $0x8] sm:$0xff]
  %v70 = vld [vmem:[%s4 + $0x10] sm:$0xff]
  %v71 = vld [vmem:[%s4 + $0x18] sm:$0xff]
  %v72 = vld [vmem:[%s5] sm:$0x1]
  %v74 = vperm.slane %v72, 0
  %vm76 = vcmask 261120
  %v78 = vsel %vm76, %v66, 0
  %80 = vmatpush.msra.mxu0 0.0
  %81 = vmatpush.msra.mxu0 0.0
  %82 = vmatpush.msra.mxu0 0.0
  %83 = vmatpush.msra.mxu0 0.0
  %84 = vmatpush.msra.mxu0 0.0
  %85 = vmatpush.msra.mxu0 0.0
  %86 = vmatpush.msra.mxu0 0.0
  %87 = vmatpush.msra.mxu0 0.0
  %88 = vmatpush.msra.mxu0 0.0
  %89 = vmatpush.msra.mxu0 0.0
  %90 = vmatpush.msra.mxu0 0.0
  %91 = vmatpush.msra.mxu0 0.0
  %92 = vmatpush.msra.mxu0 %v71
  %93 = vmatpush.msra.mxu0 %v70
  %94 = vmatpush.msra.mxu0 %v69
  %95 = vmatpush.msra.mxu0 %v68
  %96 = vmatmul.f32.gmra.mxu0 %v78
  %v97 = vpop.f32.mrf.mxu0
  %v98 = vadd.f32 %v74, %v97
  %99 = vdwg.mxu0
  %v100 = vtanh.pop %v98
  %v101 = vld [vmem:[%s2] sm:$0xff]
  %v102 = vld [vmem:[%s2 + $0x8] sm:$0xff]
  %v103 = vld [vmem:[%s2 + $0x10] sm:$0xff]
  %v104 = vld [vmem:[%s2 + $0x18] sm:$0xff]
  %v105 = vld [vmem:[%s2 + $0x20] sm:$0xff]
  %v106 = vld [vmem:[%s2 + $0x28] sm:$0xff]
  %v107 = vld [vmem:[%s2 + $0x30] sm:$0xff]
  %v108 = vld [vmem:[%s2 + $0x38] sm:$0xff]
  %v109 = vld [vmem:[%s2 + $0x40] sm:$0xff]
  %v110 = vld [vmem:[%s2 + $0x48] sm:$0xff]
  %v111 = vld [vmem:[%s2 + $0x50] sm:$0xff]
  %v112 = vld [vmem:[%s2 + $0x58] sm:$0xff]
  %v113 = vld [vmem:[%s2 + $0x60] sm:$0xff]
  %v114 = vld [vmem:[%s2 + $0x68] sm:$0xff]
  %v115 = vld [vmem:[%s2 + $0x70] sm:$0xff]
  %v116 = vld [vmem:[%s2 + $0x78] sm:$0xff]
  %v117 = vld [vmem:[%s6] sm:$0xff]
  %v118 = vld [vmem:[%s6 + $0x8] sm:$0xff]
  %v119 = vld [vmem:[%s6 + $0x10] sm:$0xff]
  %v120 = vld [vmem:[%s6 + $0x18] sm:$0xff]
  %v121 = vld [vmem:[%s7] sm:$0x1]
  %v123 = vperm.slane %v121, 0
  %v126 = vsel %vm76, %v101, 0
  %v129 = vsel %vm76, %v102, 0
  %v132 = vsel %vm76, %v103, 0
  %v135 = vsel %vm76, %v104, 0
  %v138 = vsel %vm76, %v105, 0
  %v141 = vsel %vm76, %v106, 0
  %v144 = vsel %vm76, %v107, 0
  %v147 = vsel %vm76, %v108, 0
  %v150 = vsel %vm76, %v109, 0
  %v153 = vsel %vm76, %v110, 0
  %v156 = vsel %vm76, %v111, 0
  %v159 = vsel %vm76, %v112, 0
  %v162 = vsel %vm76, %v113, 0
  %v165 = vsel %vm76, %v114, 0
  %v168 = vsel %vm76, %v115, 0
  %v171 = vsel %vm76, %v116, 0
  %173 = vmatpush.msra.mxu0 0.0
  %174 = vmatpush.msra.mxu0 0.0
  %175 = vmatpush.msra.mxu0 0.0
  %176 = vmatpush.msra.mxu0 0.0
  %177 = vmatpush.msra.mxu0 0.0
  %178 = vmatpush.msra.mxu0 0.0
  %179 = vmatpush.msra.mxu0 0.0
  %180 = vmatpush.msra.mxu0 0.0
  %181 = vmatpush.msra.mxu0 0.0
  %182 = vmatpush.msra.mxu0 0.0
  %183 = vmatpush.msra.mxu0 0.0
  %184 = vmatpush.msra.mxu0 0.0
  %185 = vmatpush.msra.mxu0 %v120
  %186 = vmatpush.msra.mxu0 %v119
  %187 = vmatpush.msra.mxu0 %v118
  %188 = vmatpush.msra.mxu0 %v117
  %189 = vmatmul.f32.gmra.mxu0 %v126
  %v190 = vpop.f32.mrf.mxu0
  %v191 = vadd.f32 %v123, %v190
  %192 = vmatmul.f32.gmra.mxu0 %v129
  %v193 = vpop.f32.mrf.mxu0
  %v194 = vadd.f32 %v123, %v193
  %195 = vmatmul.f32.gmra.mxu0 %v132
  %v196 = vpop.f32.mrf.mxu0
  %v197 = vadd.f32 %v123, %v196
  %198 = vmatmul.f32.gmra.mxu0 %v135
  %v199 = vpop.f32.mrf.mxu0
  %v200 = vadd.f32 %v123, %v199
  %201 = vmatmul.f32.gmra.mxu0 %v138
  %v202 = vpop.f32.mrf.mxu0
  %v203 = vadd.f32 %v123, %v202
  %204 = vmatmul.f32.gmra.mxu0 %v141
  %v205 = vpop.f32.mrf.mxu0
  %v206 = vadd.f32 %v123, %v205
  %207 = vmatmul.f32.gmra.mxu0 %v144
  %v208 = vpop.f32.mrf.mxu0
  %v209 = vadd.f32 %v123, %v208
  %210 = vmatmul.f32.gmra.mxu0 %v147
  %v211 = vpop.f32.mrf.mxu0
  %v212 = vadd.f32 %v123, %v211
  %213 = vmatmul.f32.gmra.mxu0 %v150
  %v214 = vpop.f32.mrf.mxu0
  %v215 = vadd.f32 %v123, %v214
  %216 = vmatmul.f32.gmra.mxu0 %v153
  %v217 = vpop.f32.mrf.mxu0
  %v218 = vadd.f32 %v123, %v217
  %219 = vmatmul.f32.gmra.mxu0 %v156
  %v220 = vpop.f32.mrf.mxu0
  %v221 = vadd.f32 %v123, %v220
  %222 = vmatmul.f32.gmra.mxu0 %v159
  %v223 = vpop.f32.mrf.mxu0
  %v224 = vadd.f32 %v123, %v223
  %225 = vmatmul.f32.gmra.mxu0 %v162
  %v226 = vpop.f32.mrf.mxu0
  %v227 = vadd.f32 %v123, %v226
  %228 = vmatmul.f32.gmra.mxu0 %v165
  %v229 = vpop.f32.mrf.mxu0
  %v230 = vadd.f32 %v123, %v229
  %231 = vmatmul.f32.gmra.mxu0 %v168
  %v232 = vpop.f32.mrf.mxu0
  %v233 = vadd.f32 %v123, %v232
  %234 = vmatmul.f32.gmra.mxu0 %v171
  %v235 = vpop.f32.mrf.mxu0
  %v236 = vadd.f32 %v123, %v235
  %237 = vdwg.mxu0
  %v238 = vmax.f32 %v191, 0.0
  %v239 = vmax.f32 %v194, 0.0
  %v240 = vmax.f32 %v197, 0.0
  %v241 = vmax.f32 %v200, 0.0
  %v242 = vmax.f32 %v203, 0.0
  %v243 = vmax.f32 %v206, 0.0
  %v244 = vmax.f32 %v209, 0.0
  %v245 = vmax.f32 %v212, 0.0
  %v246 = vmax.f32 %v215, 0.0
  %v247 = vmax.f32 %v218, 0.0
  %v248 = vmax.f32 %v221, 0.0
  %v249 = vmax.f32 %v224, 0.0
  %v250 = vmax.f32 %v227, 0.0
  %v251 = vmax.f32 %v230, 0.0
  %v252 = vmax.f32 %v233, 0.0
  %v253 = vmax.f32 %v236, 0.0
  %v254 = vld [vmem:[%s3] sm:$0xff]
  %255 = vmatpush.msra.mxu0 %v253
  %256 = vmatpush.msra.mxu0 %v252
  %257 = vmatpush.msra.mxu0 %v251
  %258 = vmatpush.msra.mxu0 %v250
  %259 = vmatpush.msra.mxu0 %v249
  %260 = vmatpush.msra.mxu0 %v248
  %261 = vmatpush.msra.mxu0 %v247
  %262 = vmatpush.msra.mxu0 %v246
  %263 = vmatpush.msra.mxu0 %v245
  %264 = vmatpush.msra.mxu0 %v244
  %265 = vmatpush.msra.mxu0 %v243
  %266 = vmatpush.msra.mxu0 %v242
  %267 = vmatpush.msra.mxu0 %v241
  %268 = vmatpush.msra.mxu0 %v240
  %269 = vmatpush.msra.mxu0 %v239
  %270 = vmatpush.msra.mxu0 %v238
  %271 = vmatmul.f32.gmra.mxu0 %v254
  %v272 = vpop.f32.mrf.mxu0
  %v273 = vadd.f32 0.0, %v272
  %274 = vdwg.mxu0
  %276 = vrot.lane.b32.xlu0 %v273, 32
  %v277 = vpop.permute.xlu0 %276
  %v279 = vsel %vm76, %v100, %v277
  %vm280 = vcmask 785408
  %v281 = vsel %vm280, %v279, 0.0
  %v282 = vld [vmem:[%s8] sm:$0xff]
  %v283 = vld [vmem:[%s8 + $0x8] sm:$0xff]
  %v284 = vld [vmem:[%s8 + $0x10] sm:$0xff]
  %v285 = vld [vmem:[%s8 + $0x18] sm:$0xff]
  %v286 = vld [vmem:[%s8 + $0x20] sm:$0xff]
  %v287 = vld [vmem:[%s8 + $0x28] sm:$0xff]
  %v288 = vld [vmem:[%s8 + $0x30] sm:$0xff]
  %v289 = vld [vmem:[%s8 + $0x38] sm:$0xff]
  %v290 = vld [vmem:[%s8 + $0x40] sm:$0xff]
  %v291 = vld [vmem:[%s8 + $0x48] sm:$0xff]
  %v292 = vld [vmem:[%s8 + $0x50] sm:$0xff]
  %v293 = vld [vmem:[%s8 + $0x58] sm:$0xff]
  %v294 = vld [vmem:[%s8 + $0x60] sm:$0xff]
  %v295 = vld [vmem:[%s8 + $0x68] sm:$0xff]
  %v296 = vld [vmem:[%s8 + $0x70] sm:$0xff]
  %v297 = vld [vmem:[%s8 + $0x78] sm:$0xff]
  %v298 = vld [vmem:[%s8 + $0x80] sm:$0xff]
  %v299 = vld [vmem:[%s8 + $0x88] sm:$0xff]
  %v300 = vld [vmem:[%s8 + $0x90] sm:$0xff]
  %v301 = vld [vmem:[%s8 + $0x98] sm:$0xff]
  %v302 = vld [vmem:[%s8 + $0xa0] sm:$0xff]
  %v303 = vld [vmem:[%s8 + $0xa8] sm:$0xff]
  %v304 = vld [vmem:[%s8 + $0xb0] sm:$0xff]
  %v305 = vld [vmem:[%s8 + $0xb8] sm:$0xff]
  %v306 = vld [vmem:[%s8 + $0xc0] sm:$0xff]
  %v307 = vld [vmem:[%s8 + $0xc8] sm:$0xff]
  %v308 = vld [vmem:[%s8 + $0xd0] sm:$0xff]
  %v309 = vld [vmem:[%s8 + $0xd8] sm:$0xff]
  %v310 = vld [vmem:[%s8 + $0xe0] sm:$0xff]
  %v311 = vld [vmem:[%s8 + $0xe8] sm:$0xff]
  %v312 = vld [vmem:[%s8 + $0xf0] sm:$0xff]
  %v313 = vld [vmem:[%s8 + $0xf8] sm:$0xff]
  %v314 = vld [vmem:[%s9] sm:$0x3]
  %v316 = vperm.slane %v314, 0
  %v317 = vperm.slane %v314, 1
  %320 = vmatpush.msra.mxu0 %v312
  %321 = vmatpush.msra.mxu0 %v310
  %322 = vmatpush.msra.mxu0 %v308
  %323 = vmatpush.msra.mxu0 %v306
  %324 = vmatpush.msra.mxu0 %v304
  %325 = vmatpush.msra.mxu0 %v302
  %326 = vmatpush.msra.mxu0 %v300
  %327 = vmatpush.msra.mxu0 %v298
  %328 = vmatpush.msra.mxu0 %v296
  %329 = vmatpush.msra.mxu0 %v294
  %330 = vmatpush.msra.mxu0 %v292
  %331 = vmatpush.msra.mxu0 %v290
  %332 = vmatpush.msra.mxu0 %v288
  %333 = vmatpush.msra.mxu0 %v286
  %334 = vmatpush.msra.mxu0 %v284
  %335 = vmatpush.msra.mxu0 %v282
  %336 = vmatmul.f32.gmra.mxu0 %v281
  %v337 = vpop.f32.mrf.mxu0
  %v338 = vadd.f32 %v316, %v337
  %339 = vdwg.mxu0
  %340 = vmatpush.msra.mxu0 %v313
  %341 = vmatpush.msra.mxu0 %v311
  %342 = vmatpush.msra.mxu0 %v309
  %343 = vmatpush.msra.mxu0 %v307
  %344 = vmatpush.msra.mxu0 %v305
  %345 = vmatpush.msra.mxu0 %v303
  %346 = vmatpush.msra.mxu0 %v301
  %347 = vmatpush.msra.mxu0 %v299
  %348 = vmatpush.msra.mxu0 %v297
  %349 = vmatpush.msra.mxu0 %v295
  %350 = vmatpush.msra.mxu0 %v293
  %351 = vmatpush.msra.mxu0 %v291
  %352 = vmatpush.msra.mxu0 %v289
  %353 = vmatpush.msra.mxu0 %v287
  %354 = vmatpush.msra.mxu0 %v285
  %355 = vmatpush.msra.mxu0 %v283
  %356 = vmatmul.f32.gmra.mxu0 %v281
  %v357 = vpop.f32.mrf.mxu0
  %v358 = vadd.f32 %v317, %v357
  %359 = vdwg.mxu0
  %v360 = vmax.f32 %v338, 0.0
  %v361 = vmax.f32 %v358, 0.0
  %v362 = vld [vmem:[%s10] sm:$0xff]
  %v363 = vld [vmem:[%s10 + $0x8] sm:$0xff]
  %v364 = vld [vmem:[%s10 + $0x10] sm:$0xff]
  %v365 = vld [vmem:[%s10 + $0x18] sm:$0xff]
  %v366 = vld [vmem:[%s10 + $0x20] sm:$0xff]
  %v367 = vld [vmem:[%s10 + $0x28] sm:$0xff]
  %v368 = vld [vmem:[%s10 + $0x30] sm:$0xff]
  %v369 = vld [vmem:[%s10 + $0x38] sm:$0xff]
  %v370 = vld [vmem:[%s10 + $0x40] sm:$0xff]
  %v371 = vld [vmem:[%s10 + $0x48] sm:$0xff]
  %v372 = vld [vmem:[%s10 + $0x50] sm:$0xff]
  %v373 = vld [vmem:[%s10 + $0x58] sm:$0xff]
  %v374 = vld [vmem:[%s10 + $0x60] sm:$0xff]
  %v375 = vld [vmem:[%s10 + $0x68] sm:$0xff]
  %v376 = vld [vmem:[%s10 + $0x70] sm:$0xff]
  %v377 = vld [vmem:[%s10 + $0x78] sm:$0xff]
  %v378 = vld [vmem:[%s10 + $0x80] sm:$0xff]
  %v379 = vld [vmem:[%s10 + $0x88] sm:$0xff]
  %v380 = vld [vmem:[%s10 + $0x90] sm:$0xff]
  %v381 = vld [vmem:[%s10 + $0x98] sm:$0xff]
  %v382 = vld [vmem:[%s10 + $0xa0] sm:$0xff]
  %v383 = vld [vmem:[%s10 + $0xa8] sm:$0xff]
  %v384 = vld [vmem:[%s10 + $0xb0] sm:$0xff]
  %v385 = vld [vmem:[%s10 + $0xb8] sm:$0xff]
  %v386 = vld [vmem:[%s10 + $0xc0] sm:$0xff]
  %v387 = vld [vmem:[%s10 + $0xc8] sm:$0xff]
  %v388 = vld [vmem:[%s10 + $0xd0] sm:$0xff]
  %v389 = vld [vmem:[%s10 + $0xd8] sm:$0xff]
  %v390 = vld [vmem:[%s10 + $0xe0] sm:$0xff]
  %v391 = vld [vmem:[%s10 + $0xe8] sm:$0xff]
  %v392 = vld [vmem:[%s10 + $0xf0] sm:$0xff]
  %v393 = vld [vmem:[%s10 + $0xf8] sm:$0xff]
  %v394 = vld [vmem:[%s11] sm:$0x1]
  %v396 = vperm.slane %v394, 0
  %398 = vmatpush.msra.mxu0 %v377
  %399 = vmatpush.msra.mxu0 %v376
  %400 = vmatpush.msra.mxu0 %v375
  %401 = vmatpush.msra.mxu0 %v374
  %402 = vmatpush.msra.mxu0 %v373
  %403 = vmatpush.msra.mxu0 %v372
  %404 = vmatpush.msra.mxu0 %v371
  %405 = vmatpush.msra.mxu0 %v370
  %406 = vmatpush.msra.mxu0 %v369
  %407 = vmatpush.msra.mxu0 %v368
  %408 = vmatpush.msra.mxu0 %v367
  %409 = vmatpush.msra.mxu0 %v366
  %410 = vmatpush.msra.mxu0 %v365
  %411 = vmatpush.msra.mxu0 %v364
  %412 = vmatpush.msra.mxu0 %v363
  %413 = vmatpush.msra.mxu0 %v362
  %414 = vmatmul.f32.gmra.mxu0 %v360
  %v415 = vpop.f32.mrf.mxu0
  %v416 = vadd.f32 %v396, %v415
  %417 = vdwg.mxu0
  %418 = vmatpush.msra.mxu0 %v393
  %419 = vmatpush.msra.mxu0 %v392
  %420 = vmatpush.msra.mxu0 %v391
  %421 = vmatpush.msra.mxu0 %v390
  %422 = vmatpush.msra.mxu0 %v389
  %423 = vmatpush.msra.mxu0 %v388
  %424 = vmatpush.msra.mxu0 %v387
  %425 = vmatpush.msra.mxu0 %v386
  %426 = vmatpush.msra.mxu0 %v385
  %427 = vmatpush.msra.mxu0 %v384
  %428 = vmatpush.msra.mxu0 %v383
  %429 = vmatpush.msra.mxu0 %v382
  %430 = vmatpush.msra.mxu0 %v381
  %431 = vmatpush.msra.mxu0 %v380
  %432 = vmatpush.msra.mxu0 %v379
  %433 = vmatpush.msra.mxu0 %v378
  %434 = vmatmul.f32.gmra.mxu0 %v361
  %v435 = vpop.f32.mrf.mxu0
  %v436 = vadd.f32 %v416, %v435
  %437 = vdwg.mxu0
  %438 = vst [vmem:[%s12] sm:$0xff] %v436
  // Predicated region
  $region50: #{multimodal_forward.1} parent=0 // pred_check
    _
  $region51: #{multimodal_forward.1} parent=0 // pred_check_branch
    %440 = sbr.rel (0) target = $region53
  $region52: #{multimodal_forward.1} parent=0 // pred_region
    _
  $region53: #{multimodal_forward.1} parent=0 // pred_fallthru
    _
  // Predicated region
  $region54: #{multimodal_forward.1} parent=0 // pred_check
    _
  $region55: #{multimodal_forward.1} parent=0 // pred_check_branch
    %442 = sbr.rel (0) target = $region57
  $region56: #{multimodal_forward.1} parent=0 // pred_region
    _
  $region57: #{multimodal_forward.1} parent=0 // pred_fallthru
    _

</llo_original>
